<compile_context>
chip_gen: v6e
topology: v6e:2x2x1
jax: 0.10.0
libtpu: 0.0.40
codegen_flags: <defaults>
</compile_context>

<pallas_src>
import jax
import jax.numpy as jnp
from jax.experimental import pallas as pl
from jax.experimental.pallas import tpu as pltpu


def zoom_cat_kernel(la_ref, lb_ref, m_ref, s_ref, o_ref):
    """One grid step: TC channels x TH2 output row-pairs x full width.

    la_ref : (TC, TH2, 4W)  l, even columns;  lane dim = 4 consecutive l rows of width W
    lb_ref : (TC, TH2, 4W)  l, odd  columns;  same lane layout
    m_ref  : (TC, TH2, 2W)  m rows;           lane dim = [even out row | odd out row]
    s_ref  : (TC, TH2,  W)  s rows, already column-duplicated to width W
    o_ref  : (3, TC, TH2, 2W)  output groups [l_pooled, m, s_up], same lane layout as m
    """
    W = s_ref.shape[-1]

    def l_chunk(ref, q):
        # l rows 4*i2 + q (column-deinterleaved), shape (TC, TH2, W)
        return ref[:, :, pl.ds(q * W, W)]

    def pooled(q0, q1):
        # 2x2 adaptive max + avg pooling feeding one output-row parity.
        a0 = l_chunk(la_ref, q0)
        a1 = l_chunk(la_ref, q1)
        b0 = l_chunk(lb_ref, q0)
        b1 = l_chunk(lb_ref, q1)
        mx = jnp.maximum(jnp.maximum(a0, b0), jnp.maximum(a1, b1))
        av = (a0.astype(jnp.float32) + a1.astype(jnp.float32)
              + b0.astype(jnp.float32) + b1.astype(jnp.float32)) * 0.25
        return (mx.astype(jnp.float32) + av).astype(o_ref.dtype)

    # group 0: pooled l (even output rows use l rows 4i2+{0,1}, odd rows 4i2+{2,3})
    o_ref[0, :, :, pl.ds(0, W)] = pooled(0, 1)
    o_ref[0, :, :, pl.ds(W, W)] = pooled(2, 3)
    # group 1: m pass-through (identical lane layout -> plain dense block copy)
    o_ref[1] = m_ref[...]
    # group 2: nearest 2x upsample of s: row duplication = write the same slab into
    # both output-row-parity halves (column duplication was folded into s_c).
    sv = s_ref[...]
    o_ref[2, :, :, pl.ds(0, W)] = sv
    o_ref[2, :, :, pl.ds(W, W)] = sv


def _vmem_numbers():
    """Generation-aware per-step byte budget and Mosaic VMEM limit."""
    try:
        cap = int(pltpu.get_tpu_info().vmem_capacity_bytes)
    except Exception:
        cap = 64 * 1024 * 1024            # conservative: v7x per-TensorCore VMEM
    step_budget = min(3 << 20, cap // 16)  # single-buffered working set per grid step
    vmem_limit = int(min(cap // 2, max(24 << 20, 4 * step_budget + (8 << 20))))
    return step_budget, vmem_limit


def _pick_tiles(B, C, H2, W, itemsize, step_budget_bytes, min_steps=8):
    """Pick (TC, TH2): channel tile and output-row-pair tile.

    Constraints: TH2 | H2 and TH2 is a multiple of the native sublane tile (or == H2);
    TC | C; per-step working set (17 slab-units of TC*TH2*W) <= step_budget_bytes.
    Preference: meet a minimum grid length (pipeline depth / v7x 2-TC sharding),
    then maximize per-step bytes (DMA efficiency), then larger TH2.
    """
    unit = 17 * W * itemsize              # l 8W + m 2W + s W + out 6W per (chan, row-pair)
    sub = 8 * max(1, 4 // itemsize)       # native sublane granularity (8 f32 / 16 bf16)
    th_cands = [d for d in range(1, H2 + 1)
                if H2 % d == 0 and (d % sub == 0 or d == H2)]
    tc_cands = [d for d in range(1, C + 1) if C % d == 0]
    best, best_key = None, None
    for th in th_cands:
        for tc in tc_cands:
            step_bytes = unit * th * tc
            steps = B * (C // tc) * (H2 // th)
            fits = step_bytes <= step_budget_bytes
            key = (fits, steps >= min_steps, step_bytes if fits else -step_bytes, th)
            if best_key is None or key > best_key:
                best, best_key = (tc, th), key
    return best


@jax.jit
def zoom_cat(l, m, s):
    B, C, Hl, Wl = l.shape
    _, _, H, W = m.shape
    _, _, Hs, Ws = s.shape
    assert Hl == 2 * H and Wl == 2 * W and H == 2 * Hs and W == 2 * Ws, (
        "kernel assumes the 2x FPN scale relation between l / m / s")
    H2 = H // 2
    dtype = m.dtype
    itemsize = dtype.itemsize

    # ---- wrapper layout glue ------------------------------------------------
    # (1) column de-interleave of l: the single materializing transpose left.
    l_d = jnp.transpose(l.reshape(B, C, 2 * H, W, 2), (0, 1, 4, 2, 3))
    l_d = l_d.reshape(B, C, 2, H2, 4 * W)            # (b, c, col-parity, i2, 4 rows * W)
    # (2) column-duplicate s (nearest upsample along W) -- small, 0.75X of m-size.
    s_c = jnp.repeat(s, 2, axis=3)                   # (B, C, H2, W)
    # (3) m needs no data movement: free contiguous reshape.
    m_r = m.reshape(B, C, H2, 2 * W)                 # lane = [even out row | odd out row]

    step_budget, vmem_limit = _vmem_numbers()
    TC, TH2 = _pick_tiles(B, C, H2, W, itemsize, step_budget)
    grid = (B, C // TC, H2 // TH2)

    # Advisory cost: ~8 VPU ops per m-element; bytes = l 4X + m 1X + s_c 0.5X + out 3X.
    elems = B * C * H * W
    cost = pl.CostEstimate(
        flops=8 * elems,
        transcendentals=0,
        bytes_accessed=int(8.5 * elems * itemsize),
    )

    out = pl.pallas_call(
        zoom_cat_kernel,
        out_shape=jax.ShapeDtypeStruct((B, 3, C, H2, 2 * W), dtype),
        grid=grid,
        in_specs=[
            # l, even columns (col-parity 0) and odd columns (col-parity 1).
            # On 128-MiB-VMEM parts these two specs can take pipeline_mode=pl.Buffered(3).
            pl.BlockSpec((None, TC, None, TH2, 4 * W), lambda b, c, h: (b, c, 0, h, 0)),
            pl.BlockSpec((None, TC, None, TH2, 4 * W), lambda b, c, h: (b, c, 1, h, 0)),
            pl.BlockSpec((None, TC, TH2, 2 * W), lambda b, c, h: (b, c, h, 0)),
            pl.BlockSpec((None, TC, TH2, W), lambda b, c, h: (b, c, h, 0)),
        ],
        out_specs=pl.BlockSpec((None, 3, TC, TH2, 2 * W), lambda b, c, h: (b, 0, c, h, 0)),
        compiler_params=pltpu.CompilerParams(
            dimension_semantics=("parallel", "parallel", "parallel"),
            vmem_limit_bytes=vmem_limit,
        ),
        cost_estimate=cost,
    )(l_d, l_d, m_r, s_c)

    # (B, 3, C, H2, 2W) is byte-identical to NCHW (B, 3C, H, W): free reshape, no copy.
    return out.reshape(B, 3 * C, H, W)


def zoom_cat_reference(l, m, s):
    """Pure-JAX reference mirroring the PyTorch forward (integer 2x ratios)."""
    B, C, H, W = m.shape
    lr = l.reshape(B, C, H, 2, W, 2)
    l_p = lr.max(axis=(3, 5)) + lr.mean(axis=(3, 5))
    s_up = jnp.repeat(jnp.repeat(s, 2, axis=2), 2, axis=3)
    return jnp.concatenate([l_p, m, s_up], axis=1)


if __name__ == "__main__":
    key = jax.random.PRNGKey(0)
    kl, km, ks = jax.random.split(key, 3)
    B, C, H, W = 2, 4, 16, 16
    l = jax.random.normal(kl, (B, C, 2 * H, 2 * W), dtype=jnp.float32)
    m = jax.random.normal(km, (B, C, H, W), dtype=jnp.float32)
    s = jax.random.normal(ks, (B, C, H // 2, W // 2), dtype=jnp.float32)

    out = zoom_cat(l, m, s)
    out = jax.block_until_ready(out)

    ref = zoom_cat_reference(l, m, s)
    assert out.shape == (B, 3 * C, H, W), out.shape
    assert jnp.allclose(out, ref, atol=1e-5, rtol=1e-5), "mismatch vs reference"

    print("KERNEL_OK")
</pallas_src>

<mosaic_0001>
module attributes {stable_mosaic.version = 11 : i64} {
  func.func @zoom_cat_kernel(%arg0: i32, %arg1: i32, %arg2: i32, %arg3: memref<1x1x1x8x64xf32, #tpu.memory_space<vmem>>, %arg4: memref<1x1x1x8x64xf32, #tpu.memory_space<vmem>>, %arg5: memref<1x1x8x32xf32, #tpu.memory_space<vmem>>, %arg6: memref<1x1x8x16xf32, #tpu.memory_space<vmem>>, %arg7: memref<1x3x1x8x32xf32, #tpu.memory_space<vmem>>) attributes {dimension_semantics = [#tpu.dimension_semantics<parallel>, #tpu.dimension_semantics<parallel>, #tpu.dimension_semantics<parallel>], iteration_bounds = array<i64: 2, 4, 1>, scalar_prefetch = 0 : i64, scratch_operands = 0 : i64, tpu.core_type = #tpu.core_type<tc>, window_params = [{transform_indices = @transform_0, window_bounds = array<i64: 1, 1, 1, 8, 64>}, {transform_indices = @transform_1, window_bounds = array<i64: 1, 1, 1, 8, 64>}, {transform_indices = @transform_2, window_bounds = array<i64: 1, 1, 8, 32>}, {transform_indices = @transform_3, window_bounds = array<i64: 1, 1, 8, 16>}, {transform_indices = @transform_4, window_bounds = array<i64: 1, 3, 1, 8, 32>}]} {
    %c0 = arith.constant 0 : index
    %c0_0 = arith.constant 0 : index
    %c0_1 = arith.constant 0 : index
    %c0_2 = arith.constant 0 : index
    %c0_3 = arith.constant 0 : index
    %0 = vector.load %arg3[%c0, %c0_0, %c0_1, %c0_2, %c0_3] : memref<1x1x1x8x64xf32, #tpu.memory_space<vmem>>, vector<1x1x1x8x16xf32>
    %1 = vector.shape_cast %0 : vector<1x1x1x8x16xf32> to vector<1x8x16xf32>
    %c0_4 = arith.constant 0 : index
    %c0_5 = arith.constant 0 : index
    %c0_6 = arith.constant 0 : index
    %c0_7 = arith.constant 0 : index
    %c16 = arith.constant 16 : index
    %2 = vector.load %arg3[%c0_4, %c0_5, %c0_6, %c0_7, %c16] : memref<1x1x1x8x64xf32, #tpu.memory_space<vmem>>, vector<1x1x1x8x16xf32>
    %3 = vector.shape_cast %2 : vector<1x1x1x8x16xf32> to vector<1x8x16xf32>
    %c0_8 = arith.constant 0 : index
    %c0_9 = arith.constant 0 : index
    %c0_10 = arith.constant 0 : index
    %c0_11 = arith.constant 0 : index
    %c0_12 = arith.constant 0 : index
    %4 = vector.load %arg4[%c0_8, %c0_9, %c0_10, %c0_11, %c0_12] : memref<1x1x1x8x64xf32, #tpu.memory_space<vmem>>, vector<1x1x1x8x16xf32>
    %5 = vector.shape_cast %4 : vector<1x1x1x8x16xf32> to vector<1x8x16xf32>
    %c0_13 = arith.constant 0 : index
    %c0_14 = arith.constant 0 : index
    %c0_15 = arith.constant 0 : index
    %c0_16 = arith.constant 0 : index
    %c16_17 = arith.constant 16 : index
    %6 = vector.load %arg4[%c0_13, %c0_14, %c0_15, %c0_16, %c16_17] : memref<1x1x1x8x64xf32, #tpu.memory_space<vmem>>, vector<1x1x1x8x16xf32>
    %7 = vector.shape_cast %6 : vector<1x1x1x8x16xf32> to vector<1x8x16xf32>
    %8 = arith.maximumf %1, %5 : vector<1x8x16xf32>
    %9 = arith.maximumf %3, %7 : vector<1x8x16xf32>
    %10 = arith.maximumf %8, %9 : vector<1x8x16xf32>
    %11 = arith.addf %1, %3 : vector<1x8x16xf32>
    %12 = arith.addf %11, %5 : vector<1x8x16xf32>
    %13 = arith.addf %12, %7 : vector<1x8x16xf32>
    %cst = arith.constant 2.500000e-01 : f32
    %14 = vector.broadcast %cst : f32 to vector<1x8x16xf32>
    %15 = arith.mulf %13, %14 : vector<1x8x16xf32>
    %16 = arith.addf %10, %15 : vector<1x8x16xf32>
    %c0_18 = arith.constant 0 : index
    %c0_19 = arith.constant 0 : index
    %c0_20 = arith.constant 0 : index
    %c0_21 = arith.constant 0 : index
    %c0_22 = arith.constant 0 : index
    %17 = vector.load %arg7[%c0_18, %c0_19, %c0_20, %c0_21, %c0_22] : memref<1x3x1x8x32xf32, #tpu.memory_space<vmem>>, vector<1x1x1x8x16xf32>
    %18 = vector.shape_cast %17 : vector<1x1x1x8x16xf32> to vector<1x8x16xf32>
    %19 = vector.shape_cast %16 : vector<1x8x16xf32> to vector<1x1x1x8x16xf32>
    tpu.vector_store %arg7[%c0_18, %c0_19, %c0_20, %c0_21, %c0_22], %19 {strides = array<i32>} : memref<1x3x1x8x32xf32, #tpu.memory_space<vmem>>, vector<1x1x1x8x16xf32>,
    %c0_23 = arith.constant 0 : index
    %c0_24 = arith.constant 0 : index
    %c0_25 = arith.constant 0 : index
    %c0_26 = arith.constant 0 : index
    %c32 = arith.constant 32 : index
    %20 = vector.load %arg3[%c0_23, %c0_24, %c0_25, %c0_26, %c32] : memref<1x1x1x8x64xf32, #tpu.memory_space<vmem>>, vector<1x1x1x8x16xf32>
    %21 = vector.shape_cast %20 : vector<1x1x1x8x16xf32> to vector<1x8x16xf32>
    %c0_27 = arith.constant 0 : index
    %c0_28 = arith.constant 0 : index
    %c0_29 = arith.constant 0 : index
    %c0_30 = arith.constant 0 : index
    %c48 = arith.constant 48 : index
    %22 = vector.load %arg3[%c0_27, %c0_28, %c0_29, %c0_30, %c48] : memref<1x1x1x8x64xf32, #tpu.memory_space<vmem>>, vector<1x1x1x8x16xf32>
    %23 = vector.shape_cast %22 : vector<1x1x1x8x16xf32> to vector<1x8x16xf32>
    %c0_31 = arith.constant 0 : index
    %c0_32 = arith.constant 0 : index
    %c0_33 = arith.constant 0 : index
    %c0_34 = arith.constant 0 : index
    %c32_35 = arith.constant 32 : index
    %24 = vector.load %arg4[%c0_31, %c0_32, %c0_33, %c0_34, %c32_35] : memref<1x1x1x8x64xf32, #tpu.memory_space<vmem>>, vector<1x1x1x8x16xf32>
    %25 = vector.shape_cast %24 : vector<1x1x1x8x16xf32> to vector<1x8x16xf32>
    %c0_36 = arith.constant 0 : index
    %c0_37 = arith.constant 0 : index
    %c0_38 = arith.constant 0 : index
    %c0_39 = arith.constant 0 : index
    %c48_40 = arith.constant 48 : index
    %26 = vector.load %arg4[%c0_36, %c0_37, %c0_38, %c0_39, %c48_40] : memref<1x1x1x8x64xf32, #tpu.memory_space<vmem>>, vector<1x1x1x8x16xf32>
    %27 = vector.shape_cast %26 : vector<1x1x1x8x16xf32> to vector<1x8x16xf32>
    %28 = arith.maximumf %21, %25 : vector<1x8x16xf32>
    %29 = arith.maximumf %23, %27 : vector<1x8x16xf32>
    %30 = arith.maximumf %28, %29 : vector<1x8x16xf32>
    %31 = arith.addf %21, %23 : vector<1x8x16xf32>
    %32 = arith.addf %31, %25 : vector<1x8x16xf32>
    %33 = arith.addf %32, %27 : vector<1x8x16xf32>
    %cst_41 = arith.constant 2.500000e-01 : f32
    %34 = vector.broadcast %cst_41 : f32 to vector<1x8x16xf32>
    %35 = arith.mulf %33, %34 : vector<1x8x16xf32>
    %36 = arith.addf %30, %35 : vector<1x8x16xf32>
    %c0_42 = arith.constant 0 : index
    %c0_43 = arith.constant 0 : index
    %c0_44 = arith.constant 0 : index
    %c0_45 = arith.constant 0 : index
    %c16_46 = arith.constant 16 : index
    %37 = vector.load %arg7[%c0_42, %c0_43, %c0_44, %c0_45, %c16_46] : memref<1x3x1x8x32xf32, #tpu.memory_space<vmem>>, vector<1x1x1x8x16xf32>
    %38 = vector.shape_cast %37 : vector<1x1x1x8x16xf32> to vector<1x8x16xf32>
    %39 = vector.shape_cast %36 : vector<1x8x16xf32> to vector<1x1x1x8x16xf32>
    tpu.vector_store %arg7[%c0_42, %c0_43, %c0_44, %c0_45, %c16_46], %39 {strides = array<i32>} : memref<1x3x1x8x32xf32, #tpu.memory_space<vmem>>, vector<1x1x1x8x16xf32>,
    %c0_47 = arith.constant 0 : index
    %c0_48 = arith.constant 0 : index
    %c0_49 = arith.constant 0 : index
    %c0_50 = arith.constant 0 : index
    %40 = vector.load %arg5[%c0_47, %c0_48, %c0_49, %c0_50] : memref<1x1x8x32xf32, #tpu.memory_space<vmem>>, vector<1x1x8x32xf32>
    %41 = vector.shape_cast %40 : vector<1x1x8x32xf32> to vector<1x8x32xf32>
    %c0_51 = arith.constant 0 : index
    %c1 = arith.constant 1 : index
    %c0_52 = arith.constant 0 : index
    %c0_53 = arith.constant 0 : index
    %c0_54 = arith.constant 0 : index
    %42 = vector.load %arg7[%c0_51, %c1, %c0_52, %c0_53, %c0_54] : memref<1x3x1x8x32xf32, #tpu.memory_space<vmem>>, vector<1x1x1x8x32xf32>
    %43 = vector.shape_cast %42 : vector<1x1x1x8x32xf32> to vector<1x8x32xf32>
    %44 = vector.shape_cast %41 : vector<1x8x32xf32> to vector<1x1x1x8x32xf32>
    tpu.vector_store %arg7[%c0_51, %c1, %c0_52, %c0_53, %c0_54], %44 {strides = array<i32>} : memref<1x3x1x8x32xf32, #tpu.memory_space<vmem>>, vector<1x1x1x8x32xf32>,
    %c0_55 = arith.constant 0 : index
    %c0_56 = arith.constant 0 : index
    %c0_57 = arith.constant 0 : index
    %c0_58 = arith.constant 0 : index
    %45 = vector.load %arg6[%c0_55, %c0_56, %c0_57, %c0_58] : memref<1x1x8x16xf32, #tpu.memory_space<vmem>>, vector<1x1x8x16xf32>
    %46 = vector.shape_cast %45 : vector<1x1x8x16xf32> to vector<1x8x16xf32>
    %c0_59 = arith.constant 0 : index
    %c2 = arith.constant 2 : index
    %c0_60 = arith.constant 0 : index
    %c0_61 = arith.constant 0 : index
    %c0_62 = arith.constant 0 : index
    %47 = vector.load %arg7[%c0_59, %c2, %c0_60, %c0_61, %c0_62] : memref<1x3x1x8x32xf32, #tpu.memory_space<vmem>>, vector<1x1x1x8x16xf32>
    %48 = vector.shape_cast %47 : vector<1x1x1x8x16xf32> to vector<1x8x16xf32>
    %49 = vector.shape_cast %46 : vector<1x8x16xf32> to vector<1x1x1x8x16xf32>
    tpu.vector_store %arg7[%c0_59, %c2, %c0_60, %c0_61, %c0_62], %49 {strides = array<i32>} : memref<1x3x1x8x32xf32, #tpu.memory_space<vmem>>, vector<1x1x1x8x16xf32>,
    %c0_63 = arith.constant 0 : index
    %c2_64 = arith.constant 2 : index
    %c0_65 = arith.constant 0 : index
    %c0_66 = arith.constant 0 : index
    %c16_67 = arith.constant 16 : index
    %50 = vector.load %arg7[%c0_63, %c2_64, %c0_65, %c0_66, %c16_67] : memref<1x3x1x8x32xf32, #tpu.memory_space<vmem>>, vector<1x1x1x8x16xf32>
    %51 = vector.shape_cast %50 : vector<1x1x1x8x16xf32> to vector<1x8x16xf32>
    %52 = vector.shape_cast %46 : vector<1x8x16xf32> to vector<1x1x1x8x16xf32>
    tpu.vector_store %arg7[%c0_63, %c2_64, %c0_65, %c0_66, %c16_67], %52 {strides = array<i32>} : memref<1x3x1x8x32xf32, #tpu.memory_space<vmem>>, vector<1x1x1x8x16xf32>,
    return
  }
  func.func @transform_0(%arg0: i32, %arg1: i32, %arg2: i32) -> (i32, i32, i32, i32, i32) {
    %c0_i32 = arith.constant 0 : i32
    %c0_i32_0 = arith.constant 0 : i32
    %c0_i32_1 = arith.constant 0 : i32
    return %arg0, %arg1, %c0_i32, %arg2, %c0_i32_0 : i32, i32, i32, i32, i32
  }
  func.func @transform_1(%arg0: i32, %arg1: i32, %arg2: i32) -> (i32, i32, i32, i32, i32) {
    %c1_i32 = arith.constant 1 : i32
    %c0_i32 = arith.constant 0 : i32
    %c0_i32_0 = arith.constant 0 : i32
    return %arg0, %arg1, %c1_i32, %arg2, %c0_i32 : i32, i32, i32, i32, i32
  }
  func.func @transform_2(%arg0: i32, %arg1: i32, %arg2: i32) -> (i32, i32, i32, i32) {
    %c0_i32 = arith.constant 0 : i32
    %c0_i32_0 = arith.constant 0 : i32
    return %arg0, %arg1, %arg2, %c0_i32 : i32, i32, i32, i32
  }
  func.func @transform_3(%arg0: i32, %arg1: i32, %arg2: i32) -> (i32, i32, i32, i32) {
    %c0_i32 = arith.constant 0 : i32
    %c0_i32_0 = arith.constant 0 : i32
    return %arg0, %arg1, %arg2, %c0_i32 : i32, i32, i32, i32
  }
  func.func @transform_4(%arg0: i32, %arg1: i32, %arg2: i32) -> (i32, i32, i32, i32, i32) {
    %c0_i32 = arith.constant 0 : i32
    %c0_i32_0 = arith.constant 0 : i32
    %c0_i32_1 = arith.constant 0 : i32
    return %arg0, %c0_i32, %arg1, %arg2, %c0_i32_0 : i32, i32, i32, i32, i32
  }
}

</mosaic_0001>

<llo_original>
// kernel: zoom_cat.1
$region0: #{zoom_cat.1}
  #allocation0 [shape = 'u32[]', space=smem, size = 0x4, offset = 0x4, fixed_abs, tag = 'smem constant byte address 0x4 - core index']
  #allocation1 [shape = 'u32[144,128]{1,0:T(1,128)}', space=vmem, size = 0x12000, scoped, tag = 'internal scratch']
  %s0 = inlined_call_operand.vmem [shape: f32[2,4,2,8,64], index: 0, kind: input, shape index: {}, may-alias: {0,1}]
  %s1 = inlined_call_operand.vmem [shape: f32[2,4,2,8,64], index: 1, kind: input, shape index: {}, may-alias: {0,1}]
  %s2 = inlined_call_operand.vmem [shape: f32[2,4,8,32], index: 2, kind: input, shape index: {}]
  %s3 = inlined_call_operand.vmem [shape: f32[2,4,8,16], index: 3, kind: input, shape index: {}]
  %s4 = inlined_call_operand.vmem [shape: f32[2,3,4,8,32], index: 4, kind: output, shape index: {}]
  %s5 = sld [smem:[#allocation0]]
  $region83: #{zoom_cat.1} parent=0
    _
  %s7 = ssub.s32 1, %s5
  %s8 = scalar_select 0, %s7, %s5
  $region1: #{zoom_cat.1} parent=0
    #allocation2 [shape = 'u8[24576]{0}', space=vmem, size = 0x6000, scoped, tag = 'output window, operand 0']
    loop: start=0, step=1, limit=10
    $region2: #{zoom_cat.1} parent=1 // loop_pre_header
      _
    $region3: #{zoom_cat.1} parent=1 // loop_header
      %s10 = sphi 0, %s14
      %p11 = scmp.ge.s32.totalorder %s10, 10
      %s17 = sphi 0, %s36
      %s18 = sphi 0, %s32
      %s19 = sphi 0, %s28
      %s20 = sphi 0, %s17
      %s21 = sphi 0, %s18
      %s22 = sphi 0, %s19
      %s23 = sphi 0, %s20
      %s24 = sphi 0, %s21
      %s25 = sphi 0, %s22
      %s43 = sphi 0, %s45
      %s46 = sphi 0, %s43
      %s47 = sphi 0, %s46
      %s63 = sphi 0, %s47
      %s73 = sphi 0, %s75
      %s76 = sphi 0, %s73
      %s77 = sphi 0, %s76
      %s93 = sphi 0, %s77
      %s103 = sphi 0, %s105
      %s106 = sphi 0, %s103
      %s107 = sphi 0, %s106
      %s123 = sphi 0, %s107
      %s133 = sphi 0, %s135
      %s136 = sphi 0, %s133
      %s137 = sphi 0, %s136
      %s153 = sphi 0, %s137
      %s163 = sphi 0, %s165
      %s166 = sphi 0, %s163
      %s167 = sphi 0, %s166
      %s183 = sphi 0, %s167
    $region4: #{zoom_cat.1} parent=1 // loop_header_branch
      %13 = sbr.rel (%p11) target = $region8
    $region5: #{zoom_cat.1} parent=1 // loop_body
      %s15 = ssub.s32 %s10, 1
      %s16 = ssub.s32 %s10, 2
      %s26 = sadd.s32 1, %s19
      %p27 = scmp.ge.s32.totalorder %s26, 1
      %s28 = scalar_select %p27, 0, %s26
      %s29 = sadd.s32 1, %s18
      %s30 = scalar_select %p27, %s29, %s18
      %p31 = scmp.ge.s32.totalorder %s30, 4
      %s32 = scalar_select %p31, 0, %s30
      %s33 = sadd.s32 1, %s17
      %s34 = scalar_select %p31, %s33, %s17
      %p35 = scmp.ge.s32.totalorder %s34, 2
      %s36 = scalar_select %p35, 0, %s34
      %s37 = ssub.s32 %s17, %s36
      %s38 = ssub.s32 %s18, %s32
      %s39 = sor.u32 %s37, %s38
      %s40 = ssub.s32 %s19, %s28
      %s41 = sor.u32 %s39, %s40
      %p42 = scmp.eq.s32.totalorder %s41, 0
      %s44 = sadd.s32 %s43, 1
      %s45 = scalar_select %p42, %s43, %s44
      %p48 = pneg %p42
      %p49 = scmp.eq.s32.totalorder %s10, 7
      %p50 = por %p48, %p49
      %p51 = scmp.ne.s32.totalorder %s43, %s46
      %p52 = scmp.eq.s32.totalorder %s10, 0
      %p53 = por %p51, %p52
      %p54 = scmp.ne.s32.totalorder %s43, %s46
      %p55 = scmp.eq.s32.totalorder %s15, 7
      %p56 = por %p54, %p55
      %p57 = scmp.ne.s32.totalorder %s46, %s47
      %p58 = scmp.eq.s32.totalorder %s15, 0
      %p59 = por %p57, %p58
      %p60 = scmp.ne.s32.totalorder %s46, %s47
      %p61 = scmp.eq.s32.totalorder %s16, 7
      %p62 = por %p60, %p61
      %p64 = scmp.ne.s32.totalorder %s47, %s63
      %p65 = scmp.eq.s32.totalorder %s16, 0
      %p66 = por %p64, %p65
      %s67 = ssub.s32 %s17, %s36
      %s68 = ssub.s32 %s18, %s32
      %s69 = sor.u32 %s67, %s68
      %s70 = ssub.s32 %s19, %s28
      %s71 = sor.u32 %s69, %s70
      %p72 = scmp.eq.s32.totalorder %s71, 0
      %s74 = sadd.s32 %s73, 1
      %s75 = scalar_select %p72, %s73, %s74
      %p78 = pneg %p72
      %p79 = scmp.eq.s32.totalorder %s10, 7
      %p80 = por %p78, %p79
      %p81 = scmp.ne.s32.totalorder %s73, %s76
      %p82 = scmp.eq.s32.totalorder %s10, 0
      %p83 = por %p81, %p82
      %p84 = scmp.ne.s32.totalorder %s73, %s76
      %p85 = scmp.eq.s32.totalorder %s15, 7
      %p86 = por %p84, %p85
      %p87 = scmp.ne.s32.totalorder %s76, %s77
      %p88 = scmp.eq.s32.totalorder %s15, 0
      %p89 = por %p87, %p88
      %p90 = scmp.ne.s32.totalorder %s76, %s77
      %p91 = scmp.eq.s32.totalorder %s16, 7
      %p92 = por %p90, %p91
      %p94 = scmp.ne.s32.totalorder %s77, %s93
      %p95 = scmp.eq.s32.totalorder %s16, 0
      %p96 = por %p94, %p95
      %s97 = ssub.s32 %s17, %s36
      %s98 = ssub.s32 %s18, %s32
      %s99 = sor.u32 %s97, %s98
      %s100 = ssub.s32 %s19, %s28
      %s101 = sor.u32 %s99, %s100
      %p102 = scmp.eq.s32.totalorder %s101, 0
      %s104 = sadd.s32 %s103, 1
      %s105 = scalar_select %p102, %s103, %s104
      %p108 = pneg %p102
      %p109 = scmp.eq.s32.totalorder %s10, 7
      %p110 = por %p108, %p109
      %p111 = scmp.ne.s32.totalorder %s103, %s106
      %p112 = scmp.eq.s32.totalorder %s10, 0
      %p113 = por %p111, %p112
      %p114 = scmp.ne.s32.totalorder %s103, %s106
      %p115 = scmp.eq.s32.totalorder %s15, 7
      %p116 = por %p114, %p115
      %p117 = scmp.ne.s32.totalorder %s106, %s107
      %p118 = scmp.eq.s32.totalorder %s15, 0
      %p119 = por %p117, %p118
      %p120 = scmp.ne.s32.totalorder %s106, %s107
      %p121 = scmp.eq.s32.totalorder %s16, 7
      %p122 = por %p120, %p121
      %p124 = scmp.ne.s32.totalorder %s107, %s123
      %p125 = scmp.eq.s32.totalorder %s16, 0
      %p126 = por %p124, %p125
      %s127 = ssub.s32 %s17, %s36
      %s128 = ssub.s32 %s18, %s32
      %s129 = sor.u32 %s127, %s128
      %s130 = ssub.s32 %s19, %s28
      %s131 = sor.u32 %s129, %s130
      %p132 = scmp.eq.s32.totalorder %s131, 0
      %s134 = sadd.s32 %s133, 1
      %s135 = scalar_select %p132, %s133, %s134
      %p138 = pneg %p132
      %p139 = scmp.eq.s32.totalorder %s10, 7
      %p140 = por %p138, %p139
      %p141 = scmp.ne.s32.totalorder %s133, %s136
      %p142 = scmp.eq.s32.totalorder %s10, 0
      %p143 = por %p141, %p142
      %p144 = scmp.ne.s32.totalorder %s133, %s136
      %p145 = scmp.eq.s32.totalorder %s15, 7
      %p146 = por %p144, %p145
      %p147 = scmp.ne.s32.totalorder %s136, %s137
      %p148 = scmp.eq.s32.totalorder %s15, 0
      %p149 = por %p147, %p148
      %p150 = scmp.ne.s32.totalorder %s136, %s137
      %p151 = scmp.eq.s32.totalorder %s16, 7
      %p152 = por %p150, %p151
      %p154 = scmp.ne.s32.totalorder %s137, %s153
      %p155 = scmp.eq.s32.totalorder %s16, 0
      %p156 = por %p154, %p155
      %s157 = ssub.s32 %s17, %s36
      %s158 = ssub.s32 %s18, %s32
      %s159 = sor.u32 %s157, %s158
      %s160 = ssub.s32 %s19, %s28
      %s161 = sor.u32 %s159, %s160
      %p162 = scmp.eq.s32.totalorder %s161, 0
      %s164 = sadd.s32 %s163, 1
      %s165 = scalar_select %p162, %s163, %s164
      %p168 = pneg %p162
      %p169 = scmp.eq.s32.totalorder %s10, 7
      %p170 = por %p168, %p169
      %p171 = scmp.ne.s32.totalorder %s163, %s166
      %p172 = scmp.eq.s32.totalorder %s10, 0
      %p173 = por %p171, %p172
      %p174 = scmp.ne.s32.totalorder %s163, %s166
      %p175 = scmp.eq.s32.totalorder %s15, 7
      %p176 = por %p174, %p175
      %p177 = scmp.ne.s32.totalorder %s166, %s167
      %p178 = scmp.eq.s32.totalorder %s15, 0
      %p179 = por %p177, %p178
      %p180 = scmp.ne.s32.totalorder %s166, %s167
      %p181 = scmp.eq.s32.totalorder %s16, 7
      %p182 = por %p180, %p181
      %p184 = scmp.ne.s32.totalorder %s167, %s183
      %p185 = scmp.eq.s32.totalorder %s16, 0
      %p186 = por %p184, %p185
      %p187 = scmp.le.s32.totalorder 1, %s10
      %p188 = scmp.lt.s32.totalorder %s10, 9
      %p189 = pnand %p187, %p188
      %p190 = pneg %p189
      // Predicated region
      $region9: #{zoom_cat.1} parent=5 // pred_check
        _
      $region10: #{zoom_cat.1} parent=5 // pred_check_branch
        %192 = sbr.rel (%p189) target = $region12
      $region11: #{zoom_cat.1} parent=5 // pred_region
        %s193 = ssub.s32 %s10, 1
      $region12: #{zoom_cat.1} parent=5 // pred_fallthru
        _
      %p194 = scmp.lt.s32.totalorder %s10, 8
      // Predicated region
      $region13: #{zoom_cat.1} parent=5 // pred_check
        %p195 = pneg %p194
      $region14: #{zoom_cat.1} parent=5 // pred_check_branch
        %197 = sbr.rel (%p195) target = $region16
      $region15: #{zoom_cat.1} parent=5 // pred_region
        // Predicated region
        $region17: #{zoom_cat.1} parent=15 // pred_check
          %p198 = pneg %p53
        $region18: #{zoom_cat.1} parent=15 // pred_check_branch
          %200 = sbr.rel (%p198) target = $region20
        $region19: #{zoom_cat.1} parent=15 // pred_region
          %p201 = scmp.lt.s32.totalorder %s17, 1
          %s202 = scalar_select %p201, %s17, 1
          %p203 = scmp.lt.s32.totalorder %s18, 3
          %s204 = scalar_select %p203, %s18, 3
          %p205 = scmp.lt.s32.totalorder %s19, 0
          %s206 = scalar_select %p205, %s19, 0
          %s207 = smul.addr %s204, 2
          %s208 = sadd.s32 %s206, %s207
          %s209 = smul.addr %s202, 8
          %s210 = sadd.s32 %s208, %s209
          %s211 = smul.addr %s210, 8
          %s212 = scalar_lea.vmem %s0, %s211
        $region20: #{zoom_cat.1} parent=15 // pred_fallthru
          _
        // Predicated region
        $region21: #{zoom_cat.1} parent=15 // pred_check
          %p213 = pneg %p83
        $region22: #{zoom_cat.1} parent=15 // pred_check_branch
          %215 = sbr.rel (%p213) target = $region24
        $region23: #{zoom_cat.1} parent=15 // pred_region
          %p216 = scmp.lt.s32.totalorder %s17, 1
          %s217 = scalar_select %p216, %s17, 1
          %p218 = scmp.lt.s32.totalorder %s18, 3
          %s219 = scalar_select %p218, %s18, 3
          %p220 = scmp.lt.s32.totalorder %s19, 0
          %s221 = scalar_select %p220, %s19, 0
          %s222 = sadd.s32 %s221, 1
          %s223 = smul.addr %s219, 2
          %s224 = sadd.s32 %s222, %s223
          %s225 = smul.addr %s217, 8
          %s226 = sadd.s32 %s224, %s225
          %s227 = smul.addr %s226, 8
          %s228 = scalar_lea.vmem %s1, %s227
        $region24: #{zoom_cat.1} parent=15 // pred_fallthru
          _
        // Predicated region
        $region25: #{zoom_cat.1} parent=15 // pred_check
          %p229 = pneg %p113
        $region26: #{zoom_cat.1} parent=15 // pred_check_branch
          %231 = sbr.rel (%p229) target = $region28
        $region27: #{zoom_cat.1} parent=15 // pred_region
          %p232 = scmp.lt.s32.totalorder %s17, 1
          %s233 = scalar_select %p232, %s17, 1
          %p234 = scmp.lt.s32.totalorder %s18, 3
          %s235 = scalar_select %p234, %s18, 3
          %p236 = scmp.lt.s32.totalorder %s19, 0
          %s237 = scalar_select %p236, %s19, 0
          %s238 = sadd.s32 %s237, %s235
          %s239 = smul.addr %s233, 4
          %s240 = sadd.s32 %s238, %s239
          %s241 = smul.addr %s240, 8
          %s242 = scalar_lea.vmem %s2, %s241
        $region28: #{zoom_cat.1} parent=15 // pred_fallthru
          _
        // Predicated region
        $region29: #{zoom_cat.1} parent=15 // pred_check
          %p243 = pneg %p143
        $region30: #{zoom_cat.1} parent=15 // pred_check_branch
          %245 = sbr.rel (%p243) target = $region32
        $region31: #{zoom_cat.1} parent=15 // pred_region
          %p246 = scmp.lt.s32.totalorder %s17, 1
          %s247 = scalar_select %p246, %s17, 1
          %p248 = scmp.lt.s32.totalorder %s18, 3
          %s249 = scalar_select %p248, %s18, 3
          %p250 = scmp.lt.s32.totalorder %s19, 0
          %s251 = scalar_select %p250, %s19, 0
          %s252 = sadd.s32 %s251, %s249
          %s253 = smul.addr %s247, 4
          %s254 = sadd.s32 %s252, %s253
          %s255 = smul.addr %s254, 8
          %s256 = scalar_lea.vmem %s3, %s255
        $region32: #{zoom_cat.1} parent=15 // pred_fallthru
          _
      $region16: #{zoom_cat.1} parent=5 // pred_fallthru
        _
      %p257 = scmp.le.s32.totalorder 1, %s10
      %p258 = scmp.lt.s32.totalorder %s10, 9
      %p259 = pnand %p257, %p258
      %p260 = pneg %p259
      // Predicated region
      $region33: #{zoom_cat.1} parent=5 // pred_check
        _
      $region34: #{zoom_cat.1} parent=5 // pred_check_branch
        %262 = sbr.rel (%p259) target = $region36
      $region35: #{zoom_cat.1} parent=5 // pred_region
        %s263 = ssub.s32 %s10, 1
        %p264 = scmp.lt.s32.totalorder %s20, 1
        %s265 = scalar_select %p264, %s20, 1
        %p266 = scmp.lt.s32.totalorder %s21, 3
        %s267 = scalar_select %p266, %s21, 3
        %p268 = scmp.lt.s32.totalorder %s22, 0
        %s269 = scalar_select %p268, %s22, 0
        %s270 = smul.addr %s267, 2
        %s271 = sadd.s32 %s269, %s270
        %s272 = smul.addr %s265, 8
        %s273 = sadd.s32 %s271, %s272
        %s274 = smul.addr %s273, 8
        %s275 = scalar_lea.vmem %s0, %s274
        %p276 = pneg %p59
        %p277 = pneg %p56
        %p278 = scmp.lt.s32.totalorder %s20, 1
        %s279 = scalar_select %p278, %s20, 1
        %p280 = scmp.lt.s32.totalorder %s21, 3
        %s281 = scalar_select %p280, %s21, 3
        %p282 = scmp.lt.s32.totalorder %s22, 0
        %s283 = scalar_select %p282, %s22, 0
        %s284 = sadd.s32 %s283, 1
        %s285 = smul.addr %s281, 2
        %s286 = sadd.s32 %s284, %s285
        %s287 = smul.addr %s279, 8
        %s288 = sadd.s32 %s286, %s287
        %s289 = smul.addr %s288, 8
        %s290 = scalar_lea.vmem %s1, %s289
        %p291 = pneg %p89
        %p292 = pneg %p86
        %p293 = scmp.lt.s32.totalorder %s20, 1
        %s294 = scalar_select %p293, %s20, 1
        %p295 = scmp.lt.s32.totalorder %s21, 3
        %s296 = scalar_select %p295, %s21, 3
        %p297 = scmp.lt.s32.totalorder %s22, 0
        %s298 = scalar_select %p297, %s22, 0
        %s299 = sadd.s32 %s298, %s296
        %s300 = smul.addr %s294, 4
        %s301 = sadd.s32 %s299, %s300
        %s302 = smul.addr %s301, 8
        %s303 = scalar_lea.vmem %s2, %s302
        %p304 = pneg %p119
        %p305 = pneg %p116
        %p306 = scmp.lt.s32.totalorder %s20, 1
        %s307 = scalar_select %p306, %s20, 1
        %p308 = scmp.lt.s32.totalorder %s21, 3
        %s309 = scalar_select %p308, %s21, 3
        %p310 = scmp.lt.s32.totalorder %s22, 0
        %s311 = scalar_select %p310, %s22, 0
        %s312 = sadd.s32 %s311, %s309
        %s313 = smul.addr %s307, 4
        %s314 = sadd.s32 %s312, %s313
        %s315 = smul.addr %s314, 8
        %s316 = scalar_lea.vmem %s3, %s315
        %p317 = pneg %p149
        %p318 = pneg %p146
        %p319 = pneg %p179
        %p320 = pneg %p176
        %s321 = sand.u32 %s166, 1
        %s322 = sand.u32 %s166, 1
        %s323 = smul.addr %s322, 24
        %s324 = scalar_lea.vmem [#allocation2], %s323
        %p325 = scmp.lt.s32.totalorder %s20, 1
        %s326 = scalar_select %p325, %s20, 1
        %p327 = scmp.lt.s32.totalorder %s21, 3
        %s328 = scalar_select %p327, %s21, 3
        %p329 = scmp.lt.s32.totalorder %s22, 0
        %s330 = scalar_select %p329, %s22, 0
        %s331 = smul.addr %s328, 2
        %s332 = sadd.s32 %s330, %s331
        %s333 = smul.addr %s326, 8
        %s334 = sadd.s32 %s332, %s333
        %s335 = smul.addr %s334, 8
        %s336 = scalar_lea.vmem %s0, %s335
        %p337 = scmp.lt.s32.totalorder %s20, 1
        %s338 = scalar_select %p337, %s20, 1
        %p339 = scmp.lt.s32.totalorder %s21, 3
        %s340 = scalar_select %p339, %s21, 3
        %p341 = scmp.lt.s32.totalorder %s22, 0
        %s342 = scalar_select %p341, %s22, 0
        %s343 = sadd.s32 %s342, 1
        %s344 = smul.addr %s340, 2
        %s345 = sadd.s32 %s343, %s344
        %s346 = smul.addr %s338, 8
        %s347 = sadd.s32 %s345, %s346
        %s348 = smul.addr %s347, 8
        %s349 = scalar_lea.vmem %s1, %s348
        %p350 = scmp.lt.s32.totalorder %s20, 1
        %s351 = scalar_select %p350, %s20, 1
        %p352 = scmp.lt.s32.totalorder %s21, 3
        %s353 = scalar_select %p352, %s21, 3
        %p354 = scmp.lt.s32.totalorder %s22, 0
        %s355 = scalar_select %p354, %s22, 0
        %s356 = sadd.s32 %s355, %s353
        %s357 = smul.addr %s351, 4
        %s358 = sadd.s32 %s356, %s357
        %s359 = smul.addr %s358, 8
        %s360 = scalar_lea.vmem %s2, %s359
        %p361 = scmp.lt.s32.totalorder %s20, 1
        %s362 = scalar_select %p361, %s20, 1
        %p363 = scmp.lt.s32.totalorder %s21, 3
        %s364 = scalar_select %p363, %s21, 3
        %p365 = scmp.lt.s32.totalorder %s22, 0
        %s366 = scalar_select %p365, %s22, 0
        %s367 = sadd.s32 %s366, %s364
        %s368 = smul.addr %s362, 4
        %s369 = sadd.s32 %s367, %s368
        %s370 = smul.addr %s369, 8
        %s371 = scalar_lea.vmem %s3, %s370
        %v372 = vld [vmem:[%s336] sm:$0xff]
        %v373 = vld [vmem:[%s349] sm:$0xff]
        %v374 = vmax.f32 %v372, %v373
        %376 = vrot.lane.b32.xlu0 %v374, 112
        %v377 = vpop.permute.xlu0 %376
        %v379 = vmax.f32 %v374, %v377
        %381 = vrot.lane.b32.xlu0 %v372, 112
        %v382 = vpop.permute.xlu0 %381
        %v384 = vadd.f32 %v372, %v382
        %v385 = vadd.f32 %v384, %v373
        %387 = vrot.lane.b32.xlu0 %v373, 112
        %v388 = vpop.permute.xlu0 %387
        %v390 = vadd.f32 %v385, %v388
        %v391 = vmul.f32 %v390, 0.25
        %v392 = vadd.f32 %v379, %v391
        %vm393 = vcmask 130048
        %394 = vst.msk [vmem:[%s324] sm:$0xff] %vm393, %v392
        %v395 = vld [vmem:[%s336] sm:$0xff]
        %v396 = vld [vmem:[%s349] sm:$0xff]
        %v397 = vmax.f32 %v395, %v396
        %399 = vrot.lane.b32.xlu0 %v397, 112
        %v400 = vpop.permute.xlu0 %399
        %v402 = vmax.f32 %v397, %v400
        %404 = vrot.lane.b32.xlu0 %v395, 112
        %v405 = vpop.permute.xlu0 %404
        %v407 = vadd.f32 %v395, %v405
        %v408 = vadd.f32 %v407, %v396
        %410 = vrot.lane.b32.xlu0 %v396, 112
        %v411 = vpop.permute.xlu0 %410
        %v413 = vadd.f32 %v408, %v411
        %v414 = vmul.f32 %v413, 0.25
        %v415 = vadd.f32 %v402, %v414
        %417 = vrot.lane.b32.xlu0 %v415, 112
        %v418 = vpop.permute.xlu0 %417
        %vm420 = vcmask 261248
        %421 = vst.msk [vmem:[%s324] sm:$0xff] %vm420, %v418
        %v422 = vld [vmem:[%s360] sm:$0xff]
        %s423 = scalar_lea.vmem %s324, 8 [#allocation2]
        %vm424 = vcmask 261120
        %425 = vst.msk [vmem:[%s423] sm:$0xff] %vm424, %v422
        %v426 = vld [vmem:[%s371] sm:$0xff]
        %s427 = scalar_lea.vmem %s324, 16 [#allocation2]
        %428 = vst.msk [vmem:[%s427] sm:$0xff] %vm393, %v426
        %430 = vrot.lane.b32.xlu0 %v426, 16
        %v431 = vpop.permute.xlu0 %430
        %433 = vst.msk [vmem:[%s427] sm:$0xff] %vm420, %v431
        %s434 = sand.u32 %s166, 1
        %s435 = sand.u32 %s166, 1
        %s436 = smul.addr %s435, 24
        %s437 = scalar_lea.vmem [#allocation2], %s436
        // Predicated region
        $region37: #{zoom_cat.1} parent=35 // pred_check
          %p438 = pneg %p176
        $region38: #{zoom_cat.1} parent=35 // pred_check_branch
          %440 = sbr.rel (%p438) target = $region40
        $region39: #{zoom_cat.1} parent=35 // pred_region
          %s441 = sadd.s32 %s22, %s21
          %s442 = smul.addr %s20, 12
          %s443 = sadd.s32 %s441, %s442
          %s444 = smul.addr %s443, 8
          %s445 = scalar_lea.vmem %s4, %s444
          // Predicated region
          $region41: #{zoom_cat.1} parent=39 // pred_check
            _
          $region42: #{zoom_cat.1} parent=39 // pred_check_branch
            %447 = sbr.rel (0) target = $region44
          $region43: #{zoom_cat.1} parent=39 // pred_region
            // Predicated region
            $region45: #{zoom_cat.1} parent=43 // pred_check
              _
            $region46: #{zoom_cat.1} parent=43 // pred_check_branch
              %449 = sbr.rel (0) target = $region48
            $region47: #{zoom_cat.1} parent=43 // pred_region
              // Predicated region
              $region60: #{zoom_cat.1} parent=47 // pred_check
                _
              $region61: #{zoom_cat.1} parent=47 // pred_check_branch
                %469 = sbr.rel (0) target = $region63
              $region62: #{zoom_cat.1} parent=47 // pred_region
                loop: start=0, step=1, limit=1
                $region64: #{zoom_cat.1} parent=62 // loop_pre_header
                  _
                $region65: #{zoom_cat.1} parent=62 // loop_header
                  %s471 = sphi 0, %s475
                  %p472 = scmp.ge.s32.totalorder %s471, 1
                  %s476 = sphi %s437, %s437
                  %s477 = sphi %s445, %s445
                $region66: #{zoom_cat.1} parent=62 // loop_header_branch
                  %474 = sbr.rel (%p472) target = $region70
                $region67: #{zoom_cat.1} parent=62 // loop_body
                  %v478 = vld [vmem:[%s476] sm:$0xff]
                  %479 = vst [vmem:[%s477] sm:$0xff] %v478
                  %v480 = vld [vmem:[%s476 + $0x8] sm:$0xff]
                  %481 = vst [vmem:[%s477 + $0x20] sm:$0xff] %v480
                  %v482 = vld [vmem:[%s476 + $0x10] sm:$0xff]
                  %483 = vst [vmem:[%s477 + $0x40] sm:$0xff] %v482
                $region68: #{zoom_cat.1} parent=62 // loop_footer
                  %s475 = sadd.s32 1, %s471
                $region69: #{zoom_cat.1} parent=62 // loop_footer_branch
                  %470 = sbr.rel target = $region65
                $region70: #{zoom_cat.1} parent=62 // loop_exit
                  _
              $region63: #{zoom_cat.1} parent=47 // pred_fallthru
                _
              // Predicated region
              $region71: #{zoom_cat.1} parent=47 // pred_check
                _
              $region72: #{zoom_cat.1} parent=47 // pred_check_branch
                %485 = sbr.rel target = $region74
              $region73: #{zoom_cat.1} parent=47 // pred_region
                _
              $region74: #{zoom_cat.1} parent=47 // pred_fallthru
                _
            $region48: #{zoom_cat.1} parent=43 // pred_fallthru
              _
            // Predicated region
            $region49: #{zoom_cat.1} parent=43 // pred_check
              _
            $region50: #{zoom_cat.1} parent=43 // pred_check_branch
              %451 = sbr.rel target = $region52
            $region51: #{zoom_cat.1} parent=43 // pred_region
              %s453 = ssub.s32 256, 1
              loop: start=0, step=1, limit=1
              $region53: #{zoom_cat.1} parent=51 // loop_pre_header
                _
              $region54: #{zoom_cat.1} parent=51 // loop_header
                %s455 = sphi 0, %s459
                %p456 = scmp.ge.s32.totalorder %s455, 1
                %s460 = sphi %s437, %s437
                %s461 = sphi %s445, %s445
              $region55: #{zoom_cat.1} parent=51 // loop_header_branch
                %458 = sbr.rel (%p456) target = $region59
              $region56: #{zoom_cat.1} parent=51 // loop_body
                %v462 = vld [vmem:[%s460] sm:%s453]
                %463 = vst [vmem:[%s461] sm:%s453] %v462
                %v464 = vld [vmem:[%s460 + $0x8] sm:%s453]
                %465 = vst [vmem:[%s461 + $0x20] sm:%s453] %v464
                %v466 = vld [vmem:[%s460 + $0x10] sm:%s453]
                %467 = vst [vmem:[%s461 + $0x40] sm:%s453] %v466
              $region57: #{zoom_cat.1} parent=51 // loop_footer
                %s459 = sadd.s32 1, %s455
              $region58: #{zoom_cat.1} parent=51 // loop_footer_branch
                %454 = sbr.rel target = $region54
              $region59: #{zoom_cat.1} parent=51 // loop_exit
                _
            $region52: #{zoom_cat.1} parent=43 // pred_fallthru
              _
          $region44: #{zoom_cat.1} parent=39 // pred_fallthru
            _
          %486 = vnop
        $region40: #{zoom_cat.1} parent=35 // pred_fallthru
          _
      $region36: #{zoom_cat.1} parent=5 // pred_fallthru
        _
      %p487 = scmp.le.s32.totalorder 2, %s10
      // Predicated region
      $region75: #{zoom_cat.1} parent=5 // pred_check
        %p488 = pneg %p487
      $region76: #{zoom_cat.1} parent=5 // pred_check_branch
        %490 = sbr.rel (%p488) target = $region78
      $region77: #{zoom_cat.1} parent=5 // pred_region
        %s491 = ssub.s32 %s10, 2
        // Predicated region
        $region79: #{zoom_cat.1} parent=77 // pred_check
          %p492 = pneg %p182
        $region80: #{zoom_cat.1} parent=77 // pred_check_branch
          %494 = sbr.rel (%p492) target = $region82
        $region81: #{zoom_cat.1} parent=77 // pred_region
          %s495 = sand.u32 %s167, 1
          %s496 = sand.u32 %s167, 1
          %s497 = smul.addr %s496, 24
          %s498 = scalar_lea.vmem [#allocation2], %s497
        $region82: #{zoom_cat.1} parent=77 // pred_fallthru
          _
      $region78: #{zoom_cat.1} parent=5 // pred_fallthru
        _
    $region6: #{zoom_cat.1} parent=1 // loop_footer
      %s14 = sadd.s32 1, %s10
    $region7: #{zoom_cat.1} parent=1 // loop_footer_branch
      %9 = sbr.rel target = $region3
    $region8: #{zoom_cat.1} parent=1 // loop_exit
      _

</llo_original>
